<compile_context>
chip_gen: v5e
topology: v5e:2x2
jax: 0.10.0
libtpu: 0.0.40
codegen_flags: <defaults>
</compile_context>

<pallas_src>
import functools

import jax
import jax.numpy as jnp
from jax.experimental import pallas as pl
from jax.experimental.pallas import tpu as pltpu

LANE = 128


# -----------------------------------------------------------------------------
# Fused forward kernel: one batch element per grid step, everything in VMEM.
# -----------------------------------------------------------------------------
def _fused_vision_kernel(x_ref, pos_ref, pe_w_ref, w1_ref, w2_ref,
                         head_w_ref, vec_ref, o_ref, *, softcap, num_blocks):
    D = pe_w_ref.shape[1]
    Dh = w1_ref.shape[2]
    L = num_blocks

    def vrow(i, width):
        # Static (1, width) row view of the packed, lane-padded (R, 128) table.
        return vec_ref[i:i + 1, :width]

    # ---- Patch embedding: conv(kernel=stride=patch) as one matmul ----------
    # x_ref: (Np, P)  pe_w_ref: (P, D)  pos_ref: (Np, D) (conv bias pre-fused)
    tok = jnp.dot(x_ref[...], pe_w_ref[...],
                  preferred_element_type=jnp.float32)
    tok = tok + pos_ref[...]

    # ---- Residual block stack (stand-in pre-LN MLP blocks, see TODO) -------
    # num_blocks == 2 -> static unroll is fine; switch to lax.fori_loop with
    # dynamic w1_ref[l]/w2_ref[l] indexing for deep stacks (>~4 blocks).
    for l in range(L):
        mu = jnp.mean(tok, axis=-1, keepdims=True)
        diff = tok - mu
        var = jnp.mean(diff * diff, axis=-1, keepdims=True)
        xn = diff * jax.lax.rsqrt(var + 1e-5)
        xn = xn * vrow(l, D) + vrow(L + l, D)                   # LN scale/bias
        h = jnp.dot(xn, w1_ref[l], preferred_element_type=jnp.float32)
        h = h + vrow(2 * L + l, Dh)
        # TODO(synk): PyTorch nn.GELU defaults to exact erf; tanh approx used.
        h = jax.nn.gelu(h, approximate=True)
        y = jnp.dot(h, w2_ref[l], preferred_element_type=jnp.float32)
        tok = tok + y + vrow(3 * L + l, D)

    # ---- Final LayerNorm (before pooling, as in the reference) -------------
    mu = jnp.mean(tok, axis=-1, keepdims=True)
    diff = tok - mu
    var = jnp.mean(diff * diff, axis=-1, keepdims=True)
    xn = diff * jax.lax.rsqrt(var + 1e-5)
    xn = xn * vrow(4 * L, D) + vrow(4 * L + 1, D)               # (Np, D)

    # ---- 'mean' pooling over (Hp, Wp) == mean over the Np tokens -----------
    pooled = jnp.mean(xn, axis=0, keepdims=True)                # (1, D)

    # ---- Classifier head + logit softcap (head lane-padded to 128 cols) ----
    logits = jnp.dot(pooled, head_w_ref[...],
                     preferred_element_type=jnp.float32)        # (1, KPAD)
    logits = logits + vec_ref[4 * L + 2:4 * L + 3, :]           # head bias
    logits = softcap * jnp.tanh(logits * (1.0 / softcap))       # SoftCapFunctionLayer
    o_ref[...] = logits.astype(o_ref.dtype)


# -----------------------------------------------------------------------------
# Parameter construction (deterministic, synthetic) + vector packing.
# -----------------------------------------------------------------------------
def _pad_lane(v, lane=LANE):
    v = v.reshape(-1)
    return jnp.pad(v, (0, lane - v.shape[0]))[None, :]


def init_params(key, *, C, patch, dim, num_blocks, hidden, num_classes, Np):
    P = C * patch * patch
    kpad = max(LANE, num_classes)
    ks = jax.random.split(key, 3 + num_blocks)

    # conv weight [D, C, ph, pw] (PyTorch layout) flattened to [P, D]
    pe_w = (jax.random.normal(ks[0], (dim, C, patch, patch), jnp.float32)
            * 0.02).reshape(dim, P).T
    pe_b = jnp.zeros((dim,), jnp.float32)

    pos = jax.random.truncated_normal(ks[1], -2.0, 2.0, (Np, dim),
                                      jnp.float32) * 0.02

    # head: trunc_normal_(std=2e-5), zero bias; lane-padded to kpad columns
    head_w = jax.random.truncated_normal(
        ks[2], -2.0, 2.0, (dim, num_classes), jnp.float32) * 2e-5
    head_w = jnp.pad(head_w, ((0, 0), (0, kpad - num_classes)))
    head_b = jnp.zeros((kpad,), jnp.float32)

    blk_w1, blk_w2 = [], []
    ln_w = [jnp.ones((dim,), jnp.float32) for _ in range(num_blocks)]
    ln_b = [jnp.zeros((dim,), jnp.float32) for _ in range(num_blocks)]
    b1 = [jnp.zeros((hidden,), jnp.float32) for _ in range(num_blocks)]
    b2 = [jnp.zeros((dim,), jnp.float32) for _ in range(num_blocks)]
    for l in range(num_blocks):
        kb1, kb2 = jax.random.split(ks[3 + l])
        blk_w1.append(jax.random.normal(kb1, (dim, hidden), jnp.float32) * 0.02)
        blk_w2.append(jax.random.normal(kb2, (hidden, dim), jnp.float32) * 0.02)

    # --- pack every small vector into ONE lane-padded (R, 128) table --------
    # row layout: [ln_w(0..L-1), ln_b(0..L-1), b1(0..L-1), b2(0..L-1),
    #              norm_w, norm_b, head_b]   (padded to a multiple of 8 rows)
    vec_rows = (ln_w + ln_b + b1 + b2 +
                [jnp.ones((dim,), jnp.float32),      # final norm weight
                 jnp.zeros((dim,), jnp.float32),     # final norm bias
                 head_b])
    vecs = jnp.concatenate([_pad_lane(v) for v in vec_rows], axis=0)
    pad_rows = (-vecs.shape[0]) % 8
    if pad_rows:
        vecs = jnp.pad(vecs, ((0, pad_rows), (0, 0)))

    return {
        "pe_w": pe_w,                    # (P, D)
        "pe_b": pe_b[None, :],           # (1, D)  -> fused into pos in wrapper
        "pos": pos,                      # (Np, D)
        "blk_w1": jnp.stack(blk_w1),     # (L, D, Dh)
        "blk_w2": jnp.stack(blk_w2),     # (L, Dh, D)
        "head_w": head_w,                # (D, KPAD)
        "vecs": vecs,                    # (R, 128) packed small-vector table
    }


# -----------------------------------------------------------------------------
# Forward pass: one fused pallas_call, batch grid, weights resident in VMEM.
# -----------------------------------------------------------------------------
def plstm_vision_model_forward(pixels, params, *, patch, softcap, num_classes):
    B, C, H, W = pixels.shape
    Hp, Wp = H // patch, W // patch
    Np = Hp * Wp
    P = C * patch * patch
    KPAD = params["head_w"].shape[1]
    num_blocks = params["blk_w1"].shape[0]

    # Conv(kernel=stride=patch) == non-overlapping patch extraction (layout
    # glue only; the embedding matmul runs inside the fused kernel).
    # TODO(synk): for large images fold this relayout into the kernel via a
    # manual-DMA patch gather instead of an XLA transpose.
    xp = pixels.reshape(B, C, Hp, patch, Wp, patch)
    xp = xp.transpose(0, 2, 4, 1, 3, 5).reshape(B, Np, P)

    # Conv bias fused into the positional embedding: a single (Np, D) array
    # shared by every batch tile (no B-times tiling, no redundant HBM slab).
    pos = params["pos"] + params["pe_b"]

    def full_spec(arr):
        nd = arr.ndim
        return pl.BlockSpec(arr.shape, lambda b, _nd=nd: (0,) * _nd)

    out = pl.pallas_call(
        functools.partial(_fused_vision_kernel, softcap=softcap,
                          num_blocks=num_blocks),
        out_shape=jax.ShapeDtypeStruct((B, 1, KPAD), jnp.float32),
        grid=(B,),
        in_specs=[
            pl.BlockSpec((None, Np, P), lambda b: (b, 0, 0)),   # tokens of batch b
            full_spec(pos),
            full_spec(params["pe_w"]),
            full_spec(params["blk_w1"]),
            full_spec(params["blk_w2"]),
            full_spec(params["head_w"]),
            full_spec(params["vecs"]),
        ],
        out_specs=pl.BlockSpec((None, 1, KPAD), lambda b: (b, 0, 0)),
        compiler_params=pltpu.CompilerParams(
            dimension_semantics=("parallel",)),   # megacore sharding on v7x
    )(xp, pos, params["pe_w"], params["blk_w1"], params["blk_w2"],
      params["head_w"], params["vecs"])

    return out.reshape(B, KPAD)[:, :num_classes]                # [B, K]


if __name__ == "__main__":
    # Small config consistent with the module's forward (classifier mode).
    B, C, H, W = 2, 3, 16, 16
    PATCH = 4
    DIM = 32
    HIDDEN = 64
    NUM_BLOCKS = 2
    NUM_CLASSES = 10
    SOFTCAP = 30.0
    Hp, Wp = H // PATCH, W // PATCH
    Np = Hp * Wp

    root = jax.random.PRNGKey(0)
    k_params, k_in = jax.random.split(root)
    params = init_params(k_params, C=C, patch=PATCH, dim=DIM,
                         num_blocks=NUM_BLOCKS, hidden=HIDDEN,
                         num_classes=NUM_CLASSES, Np=Np)
    pixels = jax.random.normal(k_in, (B, C, H, W), jnp.float32)

    fwd = jax.jit(functools.partial(plstm_vision_model_forward,
                                    patch=PATCH, softcap=SOFTCAP,
                                    num_classes=NUM_CLASSES))
    out = jax.block_until_ready(fwd(pixels, params))
    assert out.shape == (B, NUM_CLASSES), out.shape
    assert bool(jnp.all(jnp.isfinite(out)))
    print("KERNEL_OK")
</pallas_src>

<mosaic_0001>
module attributes {stable_mosaic.version = 11 : i64} {
  func.func @_fused_vision_kernel(%arg0: i32, %arg1: memref<1x16x48xf32, #tpu.memory_space<vmem>>, %arg2: memref<16x32xf32, #tpu.memory_space<vmem>>, %arg3: memref<48x32xf32, #tpu.memory_space<vmem>>, %arg4: memref<2x32x64xf32, #tpu.memory_space<vmem>>, %arg5: memref<2x64x32xf32, #tpu.memory_space<vmem>>, %arg6: memref<32x128xf32, #tpu.memory_space<vmem>>, %arg7: memref<16x128xf32, #tpu.memory_space<vmem>>, %arg8: memref<1x1x128xf32, #tpu.memory_space<vmem>>) attributes {dimension_semantics = [#tpu.dimension_semantics<parallel>], iteration_bounds = array<i64: 2>, scalar_prefetch = 0 : i64, scratch_operands = 0 : i64, tpu.core_type = #tpu.core_type<tc>, window_params = [{transform_indices = @transform_0, window_bounds = array<i64: 1, 16, 48>}, {pipeline_mode = #tpu.pipeline_mode<synchronous>, transform_indices = @transform_1, window_bounds = array<i64: 16, 32>}, {pipeline_mode = #tpu.pipeline_mode<synchronous>, transform_indices = @transform_2, window_bounds = array<i64: 48, 32>}, {pipeline_mode = #tpu.pipeline_mode<synchronous>, transform_indices = @transform_3, window_bounds = array<i64: 2, 32, 64>}, {pipeline_mode = #tpu.pipeline_mode<synchronous>, transform_indices = @transform_4, window_bounds = array<i64: 2, 64, 32>}, {pipeline_mode = #tpu.pipeline_mode<synchronous>, transform_indices = @transform_5, window_bounds = array<i64: 32, 128>}, {pipeline_mode = #tpu.pipeline_mode<synchronous>, transform_indices = @transform_6, window_bounds = array<i64: 16, 128>}, {transform_indices = @transform_7, window_bounds = array<i64: 1, 1, 128>}]} {
    %c0 = arith.constant 0 : index
    %c0_0 = arith.constant 0 : index
    %c0_1 = arith.constant 0 : index
    %0 = vector.load %arg1[%c0, %c0_0, %c0_1] : memref<1x16x48xf32, #tpu.memory_space<vmem>>, vector<1x16x48xf32>
    %1 = vector.shape_cast %0 : vector<1x16x48xf32> to vector<16x48xf32>
    %c0_2 = arith.constant 0 : index
    %c0_3 = arith.constant 0 : index
    %2 = vector.load %arg3[%c0_2, %c0_3] : memref<48x32xf32, #tpu.memory_space<vmem>>, vector<48x32xf32>
    %cst = arith.constant dense<0.000000e+00> : vector<16x32xf32>
    %3 = tpu.matmul %1, %2, %cst {dimension_numbers = #tpu.dot_dimension_numbers<[1], [0], [0], [1], [0, 0, 1, 1], [], []>} : vector<16x48xf32>, vector<48x32xf32>, vector<16x32xf32> -> vector<16x32xf32>
    %c0_4 = arith.constant 0 : index
    %c0_5 = arith.constant 0 : index
    %4 = vector.load %arg2[%c0_4, %c0_5] : memref<16x32xf32, #tpu.memory_space<vmem>>, vector<16x32xf32>
    %5 = arith.addf %3, %4 : vector<16x32xf32>
    %cst_6 = arith.constant dense<0.000000e+00> : vector<16xf32>
    %6 = vector.multi_reduction <add>, %5, %cst_6 [1] : vector<16x32xf32> to vector<16xf32>
    %7 = vector.shape_cast %6 : vector<16xf32> to vector<16x1xf32>
    %cst_7 = arith.constant 3.200000e+01 : f32
    %8 = vector.broadcast %cst_7 : f32 to vector<16x1xf32>
    %9 = arith.divf %7, %8 : vector<16x1xf32>
    %10 = vector.broadcast %9 : vector<16x1xf32> to vector<16x32xf32>
    %11 = arith.subf %5, %10 : vector<16x32xf32>
    %12 = arith.mulf %11, %11 : vector<16x32xf32>
    %cst_8 = arith.constant dense<0.000000e+00> : vector<16xf32>
    %13 = vector.multi_reduction <add>, %12, %cst_8 [1] : vector<16x32xf32> to vector<16xf32>
    %14 = vector.shape_cast %13 : vector<16xf32> to vector<16x1xf32>
    %cst_9 = arith.constant 3.200000e+01 : f32
    %15 = vector.broadcast %cst_9 : f32 to vector<16x1xf32>
    %16 = arith.divf %14, %15 : vector<16x1xf32>
    %cst_10 = arith.constant 9.99999974E-6 : f32
    %17 = vector.broadcast %cst_10 : f32 to vector<16x1xf32>
    %18 = arith.addf %16, %17 : vector<16x1xf32>
    %19 = math.rsqrt %18 : vector<16x1xf32>
    %20 = vector.broadcast %19 : vector<16x1xf32> to vector<16x32xf32>
    %21 = arith.mulf %11, %20 : vector<16x32xf32>
    %c0_11 = arith.constant 0 : index
    %c0_12 = arith.constant 0 : index
    %22 = vector.load %arg7[%c0_11, %c0_12] : memref<16x128xf32, #tpu.memory_space<vmem>>, vector<1x32xf32>
    %23 = vector.broadcast %22 : vector<1x32xf32> to vector<16x32xf32>
    %24 = arith.mulf %21, %23 : vector<16x32xf32>
    %c2 = arith.constant 2 : index
    %c0_13 = arith.constant 0 : index
    %25 = vector.load %arg7[%c2, %c0_13] : memref<16x128xf32, #tpu.memory_space<vmem>>, vector<1x32xf32>
    %26 = vector.broadcast %25 : vector<1x32xf32> to vector<16x32xf32>
    %27 = arith.addf %24, %26 : vector<16x32xf32>
    %c0_14 = arith.constant 0 : index
    %c0_15 = arith.constant 0 : index
    %c0_16 = arith.constant 0 : index
    %28 = vector.load %arg4[%c0_14, %c0_15, %c0_16] : memref<2x32x64xf32, #tpu.memory_space<vmem>>, vector<1x32x64xf32>
    %29 = vector.shape_cast %28 : vector<1x32x64xf32> to vector<32x64xf32>
    %cst_17 = arith.constant dense<0.000000e+00> : vector<16x64xf32>
    %30 = tpu.matmul %27, %29, %cst_17 {dimension_numbers = #tpu.dot_dimension_numbers<[1], [0], [0], [1], [0, 0, 1, 1], [], []>} : vector<16x32xf32>, vector<32x64xf32>, vector<16x64xf32> -> vector<16x64xf32>
    %c4 = arith.constant 4 : index
    %c0_18 = arith.constant 0 : index
    %31 = vector.load %arg7[%c4, %c0_18] : memref<16x128xf32, #tpu.memory_space<vmem>>, vector<1x64xf32>
    %32 = vector.broadcast %31 : vector<1x64xf32> to vector<16x64xf32>
    %33 = arith.addf %30, %32 : vector<16x64xf32>
    %34 = arith.mulf %33, %33 : vector<16x64xf32>
    %35 = arith.mulf %33, %34 : vector<16x64xf32>
    %cst_19 = arith.constant 4.471500e-02 : f32
    %36 = vector.broadcast %cst_19 : f32 to vector<16x64xf32>
    %37 = arith.mulf %36, %35 : vector<16x64xf32>
    %38 = arith.addf %33, %37 : vector<16x64xf32>
    %cst_20 = arith.constant 0.797884583 : f32
    %39 = vector.broadcast %cst_20 : f32 to vector<16x64xf32>
    %40 = arith.mulf %39, %38 : vector<16x64xf32>
    %41 = math.tanh %40 : vector<16x64xf32>
    %cst_21 = arith.constant 1.000000e+00 : f32
    %42 = vector.broadcast %cst_21 : f32 to vector<16x64xf32>
    %43 = arith.addf %42, %41 : vector<16x64xf32>
    %cst_22 = arith.constant 5.000000e-01 : f32
    %44 = vector.broadcast %cst_22 : f32 to vector<16x64xf32>
    %45 = arith.mulf %44, %43 : vector<16x64xf32>
    %46 = arith.mulf %33, %45 : vector<16x64xf32>
    %c0_23 = arith.constant 0 : index
    %c0_24 = arith.constant 0 : index
    %c0_25 = arith.constant 0 : index
    %47 = vector.load %arg5[%c0_23, %c0_24, %c0_25] : memref<2x64x32xf32, #tpu.memory_space<vmem>>, vector<1x64x32xf32>
    %48 = vector.shape_cast %47 : vector<1x64x32xf32> to vector<64x32xf32>
    %cst_26 = arith.constant dense<0.000000e+00> : vector<16x32xf32>
    %49 = tpu.matmul %46, %48, %cst_26 {dimension_numbers = #tpu.dot_dimension_numbers<[1], [0], [0], [1], [0, 0, 1, 1], [], []>} : vector<16x64xf32>, vector<64x32xf32>, vector<16x32xf32> -> vector<16x32xf32>
    %50 = arith.addf %5, %49 : vector<16x32xf32>
    %c6 = arith.constant 6 : index
    %c0_27 = arith.constant 0 : index
    %51 = vector.load %arg7[%c6, %c0_27] : memref<16x128xf32, #tpu.memory_space<vmem>>, vector<1x32xf32>
    %52 = vector.broadcast %51 : vector<1x32xf32> to vector<16x32xf32>
    %53 = arith.addf %50, %52 : vector<16x32xf32>
    %cst_28 = arith.constant dense<0.000000e+00> : vector<16xf32>
    %54 = vector.multi_reduction <add>, %53, %cst_28 [1] : vector<16x32xf32> to vector<16xf32>
    %55 = vector.shape_cast %54 : vector<16xf32> to vector<16x1xf32>
    %cst_29 = arith.constant 3.200000e+01 : f32
    %56 = vector.broadcast %cst_29 : f32 to vector<16x1xf32>
    %57 = arith.divf %55, %56 : vector<16x1xf32>
    %58 = vector.broadcast %57 : vector<16x1xf32> to vector<16x32xf32>
    %59 = arith.subf %53, %58 : vector<16x32xf32>
    %60 = arith.mulf %59, %59 : vector<16x32xf32>
    %cst_30 = arith.constant dense<0.000000e+00> : vector<16xf32>
    %61 = vector.multi_reduction <add>, %60, %cst_30 [1] : vector<16x32xf32> to vector<16xf32>
    %62 = vector.shape_cast %61 : vector<16xf32> to vector<16x1xf32>
    %cst_31 = arith.constant 3.200000e+01 : f32
    %63 = vector.broadcast %cst_31 : f32 to vector<16x1xf32>
    %64 = arith.divf %62, %63 : vector<16x1xf32>
    %cst_32 = arith.constant 9.99999974E-6 : f32
    %65 = vector.broadcast %cst_32 : f32 to vector<16x1xf32>
    %66 = arith.addf %64, %65 : vector<16x1xf32>
    %67 = math.rsqrt %66 : vector<16x1xf32>
    %68 = vector.broadcast %67 : vector<16x1xf32> to vector<16x32xf32>
    %69 = arith.mulf %59, %68 : vector<16x32xf32>
    %c1 = arith.constant 1 : index
    %c0_33 = arith.constant 0 : index
    %70 = vector.load %arg7[%c1, %c0_33] : memref<16x128xf32, #tpu.memory_space<vmem>>, vector<1x32xf32>
    %71 = vector.broadcast %70 : vector<1x32xf32> to vector<16x32xf32>
    %72 = arith.mulf %69, %71 : vector<16x32xf32>
    %c3 = arith.constant 3 : index
    %c0_34 = arith.constant 0 : index
    %73 = vector.load %arg7[%c3, %c0_34] : memref<16x128xf32, #tpu.memory_space<vmem>>, vector<1x32xf32>
    %74 = vector.broadcast %73 : vector<1x32xf32> to vector<16x32xf32>
    %75 = arith.addf %72, %74 : vector<16x32xf32>
    %c1_35 = arith.constant 1 : index
    %c0_36 = arith.constant 0 : index
    %c0_37 = arith.constant 0 : index
    %76 = vector.load %arg4[%c1_35, %c0_36, %c0_37] : memref<2x32x64xf32, #tpu.memory_space<vmem>>, vector<1x32x64xf32>
    %77 = vector.shape_cast %76 : vector<1x32x64xf32> to vector<32x64xf32>
    %cst_38 = arith.constant dense<0.000000e+00> : vector<16x64xf32>
    %78 = tpu.matmul %75, %77, %cst_38 {dimension_numbers = #tpu.dot_dimension_numbers<[1], [0], [0], [1], [0, 0, 1, 1], [], []>} : vector<16x32xf32>, vector<32x64xf32>, vector<16x64xf32> -> vector<16x64xf32>
    %c5 = arith.constant 5 : index
    %c0_39 = arith.constant 0 : index
    %79 = vector.load %arg7[%c5, %c0_39] : memref<16x128xf32, #tpu.memory_space<vmem>>, vector<1x64xf32>
    %80 = vector.broadcast %79 : vector<1x64xf32> to vector<16x64xf32>
    %81 = arith.addf %78, %80 : vector<16x64xf32>
    %82 = arith.mulf %81, %81 : vector<16x64xf32>
    %83 = arith.mulf %81, %82 : vector<16x64xf32>
    %cst_40 = arith.constant 4.471500e-02 : f32
    %84 = vector.broadcast %cst_40 : f32 to vector<16x64xf32>
    %85 = arith.mulf %84, %83 : vector<16x64xf32>
    %86 = arith.addf %81, %85 : vector<16x64xf32>
    %cst_41 = arith.constant 0.797884583 : f32
    %87 = vector.broadcast %cst_41 : f32 to vector<16x64xf32>
    %88 = arith.mulf %87, %86 : vector<16x64xf32>
    %89 = math.tanh %88 : vector<16x64xf32>
    %cst_42 = arith.constant 1.000000e+00 : f32
    %90 = vector.broadcast %cst_42 : f32 to vector<16x64xf32>
    %91 = arith.addf %90, %89 : vector<16x64xf32>
    %cst_43 = arith.constant 5.000000e-01 : f32
    %92 = vector.broadcast %cst_43 : f32 to vector<16x64xf32>
    %93 = arith.mulf %92, %91 : vector<16x64xf32>
    %94 = arith.mulf %81, %93 : vector<16x64xf32>
    %c1_44 = arith.constant 1 : index
    %c0_45 = arith.constant 0 : index
    %c0_46 = arith.constant 0 : index
    %95 = vector.load %arg5[%c1_44, %c0_45, %c0_46] : memref<2x64x32xf32, #tpu.memory_space<vmem>>, vector<1x64x32xf32>
    %96 = vector.shape_cast %95 : vector<1x64x32xf32> to vector<64x32xf32>
    %cst_47 = arith.constant dense<0.000000e+00> : vector<16x32xf32>
    %97 = tpu.matmul %94, %96, %cst_47 {dimension_numbers = #tpu.dot_dimension_numbers<[1], [0], [0], [1], [0, 0, 1, 1], [], []>} : vector<16x64xf32>, vector<64x32xf32>, vector<16x32xf32> -> vector<16x32xf32>
    %98 = arith.addf %53, %97 : vector<16x32xf32>
    %c7 = arith.constant 7 : index
    %c0_48 = arith.constant 0 : index
    %99 = vector.load %arg7[%c7, %c0_48] : memref<16x128xf32, #tpu.memory_space<vmem>>, vector<1x32xf32>
    %100 = vector.broadcast %99 : vector<1x32xf32> to vector<16x32xf32>
    %101 = arith.addf %98, %100 : vector<16x32xf32>
    %cst_49 = arith.constant dense<0.000000e+00> : vector<16xf32>
    %102 = vector.multi_reduction <add>, %101, %cst_49 [1] : vector<16x32xf32> to vector<16xf32>
    %103 = vector.shape_cast %102 : vector<16xf32> to vector<16x1xf32>
    %cst_50 = arith.constant 3.200000e+01 : f32
    %104 = vector.broadcast %cst_50 : f32 to vector<16x1xf32>
    %105 = arith.divf %103, %104 : vector<16x1xf32>
    %106 = vector.broadcast %105 : vector<16x1xf32> to vector<16x32xf32>
    %107 = arith.subf %101, %106 : vector<16x32xf32>
    %108 = arith.mulf %107, %107 : vector<16x32xf32>
    %cst_51 = arith.constant dense<0.000000e+00> : vector<16xf32>
    %109 = vector.multi_reduction <add>, %108, %cst_51 [1] : vector<16x32xf32> to vector<16xf32>
    %110 = vector.shape_cast %109 : vector<16xf32> to vector<16x1xf32>
    %cst_52 = arith.constant 3.200000e+01 : f32
    %111 = vector.broadcast %cst_52 : f32 to vector<16x1xf32>
    %112 = arith.divf %110, %111 : vector<16x1xf32>
    %cst_53 = arith.constant 9.99999974E-6 : f32
    %113 = vector.broadcast %cst_53 : f32 to vector<16x1xf32>
    %114 = arith.addf %112, %113 : vector<16x1xf32>
    %115 = math.rsqrt %114 : vector<16x1xf32>
    %116 = vector.broadcast %115 : vector<16x1xf32> to vector<16x32xf32>
    %117 = arith.mulf %107, %116 : vector<16x32xf32>
    %c8 = arith.constant 8 : index
    %c0_54 = arith.constant 0 : index
    %118 = vector.load %arg7[%c8, %c0_54] : memref<16x128xf32, #tpu.memory_space<vmem>>, vector<1x32xf32>
    %119 = vector.broadcast %118 : vector<1x32xf32> to vector<16x32xf32>
    %120 = arith.mulf %117, %119 : vector<16x32xf32>
    %c9 = arith.constant 9 : index
    %c0_55 = arith.constant 0 : index
    %121 = vector.load %arg7[%c9, %c0_55] : memref<16x128xf32, #tpu.memory_space<vmem>>, vector<1x32xf32>
    %122 = vector.broadcast %121 : vector<1x32xf32> to vector<16x32xf32>
    %123 = arith.addf %120, %122 : vector<16x32xf32>
    %cst_56 = arith.constant dense<0.000000e+00> : vector<32xf32>
    %124 = vector.multi_reduction <add>, %123, %cst_56 [0] : vector<16x32xf32> to vector<32xf32>
    %125 = vector.shape_cast %124 : vector<32xf32> to vector<1x32xf32>
    %cst_57 = arith.constant 1.600000e+01 : f32
    %126 = vector.broadcast %cst_57 : f32 to vector<1x32xf32>
    %127 = arith.divf %125, %126 : vector<1x32xf32>
    %c0_58 = arith.constant 0 : index
    %c0_59 = arith.constant 0 : index
    %128 = vector.load %arg6[%c0_58, %c0_59] : memref<32x128xf32, #tpu.memory_space<vmem>>, vector<32x128xf32>
    %cst_60 = arith.constant dense<0.000000e+00> : vector<1x128xf32>
    %129 = tpu.matmul %127, %128, %cst_60 {dimension_numbers = #tpu.dot_dimension_numbers<[1], [0], [0], [1], [0, 0, 1, 1], [], []>} : vector<1x32xf32>, vector<32x128xf32>, vector<1x128xf32> -> vector<1x128xf32>
    %c10 = arith.constant 10 : index
    %c0_61 = arith.constant 0 : index
    %130 = vector.load %arg7[%c10, %c0_61] : memref<16x128xf32, #tpu.memory_space<vmem>>, vector<1x128xf32>
    %131 = arith.addf %129, %130 : vector<1x128xf32>
    %cst_62 = arith.constant 0.0333333351 : f32
    %132 = vector.broadcast %cst_62 : f32 to vector<1x128xf32>
    %133 = arith.mulf %131, %132 : vector<1x128xf32>
    %134 = math.tanh %133 : vector<1x128xf32>
    %cst_63 = arith.constant 3.000000e+01 : f32
    %135 = vector.broadcast %cst_63 : f32 to vector<1x128xf32>
    %136 = arith.mulf %135, %134 : vector<1x128xf32>
    %c0_64 = arith.constant 0 : index
    %c0_65 = arith.constant 0 : index
    %c0_66 = arith.constant 0 : index
    %137 = vector.load %arg8[%c0_64, %c0_65, %c0_66] : memref<1x1x128xf32, #tpu.memory_space<vmem>>, vector<1x1x128xf32>
    %138 = vector.shape_cast %137 : vector<1x1x128xf32> to vector<1x128xf32>
    %139 = vector.shape_cast %136 : vector<1x128xf32> to vector<1x1x128xf32>
    tpu.vector_store %arg8[%c0_64, %c0_65, %c0_66], %139 {strides = array<i32>} : memref<1x1x128xf32, #tpu.memory_space<vmem>>, vector<1x1x128xf32>,
    return
  }
  func.func @transform_0(%arg0: i32) -> (i32, i32, i32) {
    %c0_i32 = arith.constant 0 : i32
    %c0_i32_0 = arith.constant 0 : i32
    %c0_i32_1 = arith.constant 0 : i32
    return %arg0, %c0_i32, %c0_i32_0 : i32, i32, i32
  }
  func.func @transform_1(%arg0: i32) -> (i32, i32) {
    %c0_i32 = arith.constant 0 : i32
    %c0_i32_0 = arith.constant 0 : i32
    %c0_i32_1 = arith.constant 0 : i32
    return %c0_i32, %c0_i32_0 : i32, i32
  }
  func.func @transform_2(%arg0: i32) -> (i32, i32) {
    %c0_i32 = arith.constant 0 : i32
    %c0_i32_0 = arith.constant 0 : i32
    %c0_i32_1 = arith.constant 0 : i32
    return %c0_i32, %c0_i32_0 : i32, i32
  }
  func.func @transform_3(%arg0: i32) -> (i32, i32, i32) {
    %c0_i32 = arith.constant 0 : i32
    %c0_i32_0 = arith.constant 0 : i32
    %c0_i32_1 = arith.constant 0 : i32
    %c0_i32_2 = arith.constant 0 : i32
    return %c0_i32, %c0_i32_0, %c0_i32_1 : i32, i32, i32
  }
  func.func @transform_4(%arg0: i32) -> (i32, i32, i32) {
    %c0_i32 = arith.constant 0 : i32
    %c0_i32_0 = arith.constant 0 : i32
    %c0_i32_1 = arith.constant 0 : i32
    %c0_i32_2 = arith.constant 0 : i32
    return %c0_i32, %c0_i32_0, %c0_i32_1 : i32, i32, i32
  }
  func.func @transform_5(%arg0: i32) -> (i32, i32) {
    %c0_i32 = arith.constant 0 : i32
    %c0_i32_0 = arith.constant 0 : i32
    %c0_i32_1 = arith.constant 0 : i32
    return %c0_i32, %c0_i32_0 : i32, i32
  }
  func.func @transform_6(%arg0: i32) -> (i32, i32) {
    %c0_i32 = arith.constant 0 : i32
    %c0_i32_0 = arith.constant 0 : i32
    %c0_i32_1 = arith.constant 0 : i32
    return %c0_i32, %c0_i32_0 : i32, i32
  }
  func.func @transform_7(%arg0: i32) -> (i32, i32, i32) {
    %c0_i32 = arith.constant 0 : i32
    %c0_i32_0 = arith.constant 0 : i32
    %c0_i32_1 = arith.constant 0 : i32
    return %arg0, %c0_i32, %c0_i32_0 : i32, i32, i32
  }
}

</mosaic_0001>

<llo_original>
// kernel: plstm_vision_model_forward.1
$region0: #{plstm_vision_model_forward.1}
  #allocation0 [shape = 'u32[]', space=smem, size = 0x4, offset = 0x4, fixed_abs, tag = 'smem constant byte address 0x4 - core index']
  #allocation1 [shape = 'u32[72,128]{1,0:T(1,128)}', space=vmem, size = 0x9000, scoped, tag = 'internal scratch']
  %s0 = inlined_call_operand.vmem [shape: f32[2,16,48], index: 0, kind: input, shape index: {}]
  %s1 = inlined_call_operand.vmem [shape: f32[16,32], index: 1, kind: input, shape index: {}]
  %s2 = inlined_call_operand.vmem [shape: f32[48,32], index: 2, kind: input, shape index: {}]
  %s3 = inlined_call_operand.vmem [shape: f32[2,32,64], index: 3, kind: input, shape index: {}]
  %s4 = inlined_call_operand.vmem [shape: f32[2,64,32], index: 4, kind: input, shape index: {}]
  %s5 = inlined_call_operand.vmem [shape: f32[32,128], index: 5, kind: input, shape index: {}]
  %s6 = inlined_call_operand.vmem [shape: f32[16,128], index: 6, kind: input, shape index: {}]
  %s7 = inlined_call_operand.hbm [shape: f32[2,1,128], index: 7, kind: output, shape index: {}]
  %s8 = sld [smem:[#allocation0]]
  $region61: #{plstm_vision_model_forward.1} parent=0
    _
  %s10 = ssub.s32 1, %s8
  %s11 = scalar_select 0, %s10, %s8
  $region1: #{plstm_vision_model_forward.1} parent=0
    #allocation2 [shape = 'u8[1024]{0}', space=vmem, size = 0x400, scoped, tag = 'output window, operand 0']
    #allocation3 [shape = 's32[2]{0}', space=sflag, size = 0x8, scoped, tag = 'scoped memory for plstm_vision_model_forward.1']
    %12 = vsyncpa [#allocation3], 0
    %s13 = scalar_lea.sflag [#allocation3], 1
    %14 = vsyncpa %s13, 0
    loop: start=0, step=1, limit=4
    $region2: #{plstm_vision_model_forward.1} parent=1 // loop_pre_header
      _
    $region3: #{plstm_vision_model_forward.1} parent=1 // loop_header
      %s16 = sphi 0, %s20
      %p17 = scmp.ge.s32.totalorder %s16, 4
      %s26 = sphi 0, %s28
      %s29 = sphi 0, %s26
      %s30 = sphi 0, %s29
      %s46 = sphi 0, %s30
      %s50 = sphi 0, %s50
      %s52 = sphi 0, %s50
      %s53 = sphi 0, %s52
      %s67 = sphi 0, %s53
      %s71 = sphi 0, %s71
      %s73 = sphi 0, %s71
      %s74 = sphi 0, %s73
      %s88 = sphi 0, %s74
      %s92 = sphi 0, %s92
      %s94 = sphi 0, %s92
      %s95 = sphi 0, %s94
      %s109 = sphi 0, %s95
      %s113 = sphi 0, %s113
      %s115 = sphi 0, %s113
      %s116 = sphi 0, %s115
      %s130 = sphi 0, %s116
      %s134 = sphi 0, %s134
      %s136 = sphi 0, %s134
      %s137 = sphi 0, %s136
      %s151 = sphi 0, %s137
      %s155 = sphi 0, %s155
      %s157 = sphi 0, %s155
      %s158 = sphi 0, %s157
      %s172 = sphi 0, %s158
      %s178 = sphi 0, %s180
      %s181 = sphi 0, %s178
      %s182 = sphi 0, %s181
      %s198 = sphi 0, %s182
    $region4: #{plstm_vision_model_forward.1} parent=1 // loop_header_branch
      %19 = sbr.rel (%p17) target = $region8
    $region5: #{plstm_vision_model_forward.1} parent=1 // loop_body
      %s21 = ssub.s32 %s16, 1
      %s22 = ssub.s32 %s16, 2
      %s23 = sadd.s32 %s16, 1
      %s24 = ssub.s32 %s16, %s23
      %p25 = scmp.eq.s32.totalorder %s24, 0
      %s27 = sadd.s32 %s26, 1
      %s28 = scalar_select %p25, %s26, %s27
      %p31 = pneg %p25
      %p32 = scmp.eq.s32.totalorder %s16, 1
      %p33 = por %p31, %p32
      %p34 = scmp.ne.s32.totalorder %s26, %s29
      %p35 = scmp.eq.s32.totalorder %s16, 0
      %p36 = por %p34, %p35
      %p37 = scmp.ne.s32.totalorder %s26, %s29
      %p38 = scmp.eq.s32.totalorder %s21, 1
      %p39 = por %p37, %p38
      %p40 = scmp.ne.s32.totalorder %s29, %s30
      %p41 = scmp.eq.s32.totalorder %s21, 0
      %p42 = por %p40, %p41
      %p43 = scmp.ne.s32.totalorder %s29, %s30
      %p44 = scmp.eq.s32.totalorder %s22, 1
      %p45 = por %p43, %p44
      %p47 = scmp.ne.s32.totalorder %s30, %s46
      %p48 = scmp.eq.s32.totalorder %s22, 0
      %p49 = por %p47, %p48
      %s51 = sadd.s32 %s50, 1
      %p54 = scmp.eq.s32.totalorder %s16, 1
      %p55 = scmp.ne.s32.totalorder %s50, %s52
      %p56 = scmp.eq.s32.totalorder %s16, 0
      %p57 = por %p55, %p56
      %p58 = scmp.ne.s32.totalorder %s50, %s52
      %p59 = scmp.eq.s32.totalorder %s21, 1
      %p60 = por %p58, %p59
      %p61 = scmp.ne.s32.totalorder %s52, %s53
      %p62 = scmp.eq.s32.totalorder %s21, 0
      %p63 = por %p61, %p62
      %p64 = scmp.ne.s32.totalorder %s52, %s53
      %p65 = scmp.eq.s32.totalorder %s22, 1
      %p66 = por %p64, %p65
      %p68 = scmp.ne.s32.totalorder %s53, %s67
      %p69 = scmp.eq.s32.totalorder %s22, 0
      %p70 = por %p68, %p69
      %s72 = sadd.s32 %s71, 1
      %p75 = scmp.eq.s32.totalorder %s16, 1
      %p76 = scmp.ne.s32.totalorder %s71, %s73
      %p77 = scmp.eq.s32.totalorder %s16, 0
      %p78 = por %p76, %p77
      %p79 = scmp.ne.s32.totalorder %s71, %s73
      %p80 = scmp.eq.s32.totalorder %s21, 1
      %p81 = por %p79, %p80
      %p82 = scmp.ne.s32.totalorder %s73, %s74
      %p83 = scmp.eq.s32.totalorder %s21, 0
      %p84 = por %p82, %p83
      %p85 = scmp.ne.s32.totalorder %s73, %s74
      %p86 = scmp.eq.s32.totalorder %s22, 1
      %p87 = por %p85, %p86
      %p89 = scmp.ne.s32.totalorder %s74, %s88
      %p90 = scmp.eq.s32.totalorder %s22, 0
      %p91 = por %p89, %p90
      %s93 = sadd.s32 %s92, 1
      %p96 = scmp.eq.s32.totalorder %s16, 1
      %p97 = scmp.ne.s32.totalorder %s92, %s94
      %p98 = scmp.eq.s32.totalorder %s16, 0
      %p99 = por %p97, %p98
      %p100 = scmp.ne.s32.totalorder %s92, %s94
      %p101 = scmp.eq.s32.totalorder %s21, 1
      %p102 = por %p100, %p101
      %p103 = scmp.ne.s32.totalorder %s94, %s95
      %p104 = scmp.eq.s32.totalorder %s21, 0
      %p105 = por %p103, %p104
      %p106 = scmp.ne.s32.totalorder %s94, %s95
      %p107 = scmp.eq.s32.totalorder %s22, 1
      %p108 = por %p106, %p107
      %p110 = scmp.ne.s32.totalorder %s95, %s109
      %p111 = scmp.eq.s32.totalorder %s22, 0
      %p112 = por %p110, %p111
      %s114 = sadd.s32 %s113, 1
      %p117 = scmp.eq.s32.totalorder %s16, 1
      %p118 = scmp.ne.s32.totalorder %s113, %s115
      %p119 = scmp.eq.s32.totalorder %s16, 0
      %p120 = por %p118, %p119
      %p121 = scmp.ne.s32.totalorder %s113, %s115
      %p122 = scmp.eq.s32.totalorder %s21, 1
      %p123 = por %p121, %p122
      %p124 = scmp.ne.s32.totalorder %s115, %s116
      %p125 = scmp.eq.s32.totalorder %s21, 0
      %p126 = por %p124, %p125
      %p127 = scmp.ne.s32.totalorder %s115, %s116
      %p128 = scmp.eq.s32.totalorder %s22, 1
      %p129 = por %p127, %p128
      %p131 = scmp.ne.s32.totalorder %s116, %s130
      %p132 = scmp.eq.s32.totalorder %s22, 0
      %p133 = por %p131, %p132
      %s135 = sadd.s32 %s134, 1
      %p138 = scmp.eq.s32.totalorder %s16, 1
      %p139 = scmp.ne.s32.totalorder %s134, %s136
      %p140 = scmp.eq.s32.totalorder %s16, 0
      %p141 = por %p139, %p140
      %p142 = scmp.ne.s32.totalorder %s134, %s136
      %p143 = scmp.eq.s32.totalorder %s21, 1
      %p144 = por %p142, %p143
      %p145 = scmp.ne.s32.totalorder %s136, %s137
      %p146 = scmp.eq.s32.totalorder %s21, 0
      %p147 = por %p145, %p146
      %p148 = scmp.ne.s32.totalorder %s136, %s137
      %p149 = scmp.eq.s32.totalorder %s22, 1
      %p150 = por %p148, %p149
      %p152 = scmp.ne.s32.totalorder %s137, %s151
      %p153 = scmp.eq.s32.totalorder %s22, 0
      %p154 = por %p152, %p153
      %s156 = sadd.s32 %s155, 1
      %p159 = scmp.eq.s32.totalorder %s16, 1
      %p160 = scmp.ne.s32.totalorder %s155, %s157
      %p161 = scmp.eq.s32.totalorder %s16, 0
      %p162 = por %p160, %p161
      %p163 = scmp.ne.s32.totalorder %s155, %s157
      %p164 = scmp.eq.s32.totalorder %s21, 1
      %p165 = por %p163, %p164
      %p166 = scmp.ne.s32.totalorder %s157, %s158
      %p167 = scmp.eq.s32.totalorder %s21, 0
      %p168 = por %p166, %p167
      %p169 = scmp.ne.s32.totalorder %s157, %s158
      %p170 = scmp.eq.s32.totalorder %s22, 1
      %p171 = por %p169, %p170
      %p173 = scmp.ne.s32.totalorder %s158, %s172
      %p174 = scmp.eq.s32.totalorder %s22, 0
      %p175 = por %p173, %p174
      %s176 = ssub.s32 %s16, %s23
      %p177 = scmp.eq.s32.totalorder %s176, 0
      %s179 = sadd.s32 %s178, 1
      %s180 = scalar_select %p177, %s178, %s179
      %p183 = pneg %p177
      %p184 = scmp.eq.s32.totalorder %s16, 1
      %p185 = por %p183, %p184
      %p186 = scmp.ne.s32.totalorder %s178, %s181
      %p187 = scmp.eq.s32.totalorder %s16, 0
      %p188 = por %p186, %p187
      %p189 = scmp.ne.s32.totalorder %s178, %s181
      %p190 = scmp.eq.s32.totalorder %s21, 1
      %p191 = por %p189, %p190
      %p192 = scmp.ne.s32.totalorder %s181, %s182
      %p193 = scmp.eq.s32.totalorder %s21, 0
      %p194 = por %p192, %p193
      %p195 = scmp.ne.s32.totalorder %s181, %s182
      %p196 = scmp.eq.s32.totalorder %s22, 1
      %p197 = por %p195, %p196
      %p199 = scmp.ne.s32.totalorder %s182, %s198
      %p200 = scmp.eq.s32.totalorder %s22, 0
      %p201 = por %p199, %p200
      %p202 = scmp.le.s32.totalorder 1, %s16
      %p203 = scmp.lt.s32.totalorder %s16, 3
      %p204 = pnand %p202, %p203
      %p205 = pneg %p204
      // Predicated region
      $region9: #{plstm_vision_model_forward.1} parent=5 // pred_check
        _
      $region10: #{plstm_vision_model_forward.1} parent=5 // pred_check_branch
        %207 = sbr.rel (%p204) target = $region12
      $region11: #{plstm_vision_model_forward.1} parent=5 // pred_region
        %s208 = ssub.s32 %s16, 1
        // Predicated region
        $region13: #{plstm_vision_model_forward.1} parent=11 // pred_check
          %p209 = pneg %p63
        $region14: #{plstm_vision_model_forward.1} parent=11 // pred_check_branch
          %211 = sbr.rel (%p209) target = $region16
        $region15: #{plstm_vision_model_forward.1} parent=11 // pred_region
          _
        $region16: #{plstm_vision_model_forward.1} parent=11 // pred_fallthru
          _
        // Predicated region
        $region17: #{plstm_vision_model_forward.1} parent=11 // pred_check
          %p212 = pneg %p84
        $region18: #{plstm_vision_model_forward.1} parent=11 // pred_check_branch
          %214 = sbr.rel (%p212) target = $region20
        $region19: #{plstm_vision_model_forward.1} parent=11 // pred_region
          _
        $region20: #{plstm_vision_model_forward.1} parent=11 // pred_fallthru
          _
        // Predicated region
        $region21: #{plstm_vision_model_forward.1} parent=11 // pred_check
          %p215 = pneg %p105
        $region22: #{plstm_vision_model_forward.1} parent=11 // pred_check_branch
          %217 = sbr.rel (%p215) target = $region24
        $region23: #{plstm_vision_model_forward.1} parent=11 // pred_region
          _
        $region24: #{plstm_vision_model_forward.1} parent=11 // pred_fallthru
          _
        // Predicated region
        $region25: #{plstm_vision_model_forward.1} parent=11 // pred_check
          %p218 = pneg %p126
        $region26: #{plstm_vision_model_forward.1} parent=11 // pred_check_branch
          %220 = sbr.rel (%p218) target = $region28
        $region27: #{plstm_vision_model_forward.1} parent=11 // pred_region
          _
        $region28: #{plstm_vision_model_forward.1} parent=11 // pred_fallthru
          _
        // Predicated region
        $region29: #{plstm_vision_model_forward.1} parent=11 // pred_check
          %p221 = pneg %p147
        $region30: #{plstm_vision_model_forward.1} parent=11 // pred_check_branch
          %223 = sbr.rel (%p221) target = $region32
        $region31: #{plstm_vision_model_forward.1} parent=11 // pred_region
          _
        $region32: #{plstm_vision_model_forward.1} parent=11 // pred_fallthru
          _
        // Predicated region
        $region33: #{plstm_vision_model_forward.1} parent=11 // pred_check
          %p224 = pneg %p168
        $region34: #{plstm_vision_model_forward.1} parent=11 // pred_check_branch
          %226 = sbr.rel (%p224) target = $region36
        $region35: #{plstm_vision_model_forward.1} parent=11 // pred_region
          _
        $region36: #{plstm_vision_model_forward.1} parent=11 // pred_fallthru
          _
      $region12: #{plstm_vision_model_forward.1} parent=5 // pred_fallthru
        _
      %p227 = scmp.lt.s32.totalorder %s16, 2
      // Predicated region
      $region37: #{plstm_vision_model_forward.1} parent=5 // pred_check
        %p228 = pneg %p227
      $region38: #{plstm_vision_model_forward.1} parent=5 // pred_check_branch
        %230 = sbr.rel (%p228) target = $region40
      $region39: #{plstm_vision_model_forward.1} parent=5 // pred_region
        // Predicated region
        $region41: #{plstm_vision_model_forward.1} parent=39 // pred_check
          %p231 = pneg %p36
        $region42: #{plstm_vision_model_forward.1} parent=39 // pred_check_branch
          %233 = sbr.rel (%p231) target = $region44
        $region43: #{plstm_vision_model_forward.1} parent=39 // pred_region
          %p234 = scmp.lt.s32.totalorder %s16, 1
          %s235 = scalar_select %p234, %s16, 1
          %s236 = smul.addr %s235, 2
          %s237 = smul.addr %s236, 8
          %s238 = scalar_lea.vmem %s0, %s237
        $region44: #{plstm_vision_model_forward.1} parent=39 // pred_fallthru
          _
      $region40: #{plstm_vision_model_forward.1} parent=5 // pred_fallthru
        _
      %p239 = scmp.le.s32.totalorder 1, %s16
      %p240 = scmp.lt.s32.totalorder %s16, 3
      %p241 = pnand %p239, %p240
      %p242 = pneg %p241
      // Predicated region
      $region45: #{plstm_vision_model_forward.1} parent=5 // pred_check
        _
      $region46: #{plstm_vision_model_forward.1} parent=5 // pred_check_branch
        %244 = sbr.rel (%p241) target = $region48
      $region47: #{plstm_vision_model_forward.1} parent=5 // pred_region
        %s245 = ssub.s32 %s16, 1
        %p246 = scmp.lt.s32.totalorder %s21, 1
        %s247 = scalar_select %p246, %s21, 1
        %s248 = smul.addr %s247, 2
        %s249 = smul.addr %s248, 8
        %s250 = scalar_lea.vmem %s0, %s249
        %p251 = pneg %p42
        %p252 = pneg %p39
        %p253 = pneg %p63
        %p254 = pneg %p60
        %p255 = pneg %p84
        %p256 = pneg %p81
        %p257 = pneg %p105
        %p258 = pneg %p102
        %p259 = pneg %p126
        %p260 = pneg %p123
        %p261 = pneg %p147
        %p262 = pneg %p144
        %p263 = pneg %p168
        %p264 = pneg %p165
        %p265 = pneg %p194
        %p266 = pneg %p191
        %s267 = sand.u32 %s181, 1
        %s268 = scalar_lea.sflag [#allocation3], %s267
        %s269 = sand.u32 %s181, 1
        %s270 = scalar_lea.vmem [#allocation2], %s269
        %p271 = scmp.lt.s32.totalorder %s21, 1
        %s272 = scalar_select %p271, %s21, 1
        %s273 = smul.addr %s272, 2
        %s274 = smul.addr %s273, 8
        %s275 = scalar_lea.vmem %s0, %s274
        %v276 = vld [vmem:[%s275] sm:$0xff]
        %v277 = vld [vmem:[%s275 + $0x8] sm:$0xff]
        %v278 = vld [vmem:[%s2] sm:$0xff]
        %v279 = vld [vmem:[%s2 + $0x8] sm:$0xff]
        %v280 = vld [vmem:[%s2 + $0x10] sm:$0xff]
        %v281 = vld [vmem:[%s2 + $0x18] sm:$0xff]
        %v282 = vld [vmem:[%s2 + $0x20] sm:$0xff]
        %v283 = vld [vmem:[%s2 + $0x28] sm:$0xff]
        %v284 = vld [vmem:[%s1] sm:$0xff]
        %v285 = vld [vmem:[%s1 + $0x8] sm:$0xff]
        %vm286 = vcmask 392192
        %v288 = vsel %vm286, %v276, 0
        %v291 = vsel %vm286, %v277, 0
        %293 = vmatpush.msra.mxu0 0.0
        %294 = vmatpush.msra.mxu0 0.0
        %295 = vmatpush.msra.mxu0 0.0
        %296 = vmatpush.msra.mxu0 0.0
        %297 = vmatpush.msra.mxu0 0.0
        %298 = vmatpush.msra.mxu0 0.0
        %299 = vmatpush.msra.mxu0 0.0
        %300 = vmatpush.msra.mxu0 0.0
        %301 = vmatpush.msra.mxu0 0.0
        %302 = vmatpush.msra.mxu0 0.0
        %303 = vmatpush.msra.mxu0 %v283
        %304 = vmatpush.msra.mxu0 %v282
        %305 = vmatpush.msra.mxu0 %v281
        %306 = vmatpush.msra.mxu0 %v280
        %307 = vmatpush.msra.mxu0 %v279
        %308 = vmatpush.msra.mxu0 %v278
        %309 = vmatmul.f32.gmra.mxu0 %v288
        %v310 = vpop.f32.mrf.mxu0
        %v311 = vadd.f32 %v284, %v310
        %312 = vmatmul.f32.gmra.mxu0 %v291
        %v313 = vpop.f32.mrf.mxu0
        %v314 = vadd.f32 %v285, %v313
        %315 = vdwg.mxu0
        %vm316 = vcmask 261120
        %v317 = vsel %vm316, %v311, 0.0
        %318 = vadd.xlane.f32.xlu0 %v317
        %v319 = vpop.xlane.xlu0 %318
        %v320 = vsel %vm316, %v314, 0.0
        %321 = vadd.xlane.f32.xlu0 %v320
        %v322 = vpop.xlane.xlu0 %321
        %v323 = vrcp.pop 32.0
        %v324 = vmul.f32 32.0, %v323
        %v325 = vsub.f32 1.0, %v324
        %v326 = vmul.f32 %v323, %v325
        %v327 = vadd.f32 %v323, %v326
        %vm328 = vweird.f32 %v323
        %v329 = vsel %vm328, %v323, %v327
        %v330 = vmul.f32 %v319, %v329
        %v331 = vmul.f32 %v322, %v329
        %v332 = vsub.f32 %v311, %v330
        %v333 = vsub.f32 %v314, %v331
        %v334 = vmul.f32 %v332, %v332
        %v335 = vmul.f32 %v333, %v333
        %v336 = vsel %vm316, %v334, 0.0
        %337 = vadd.xlane.f32.xlu0 %v336
        %v338 = vpop.xlane.xlu0 %337
        %v339 = vsel %vm316, %v335, 0.0
        %340 = vadd.xlane.f32.xlu0 %v339
        %v341 = vpop.xlane.xlu0 %340
        %v342 = vmul.f32 %v338, %v329
        %v343 = vmul.f32 %v341, %v329
        %v344 = vadd.f32 %v342, 1e-05
        %v345 = vadd.f32 %v343, 1e-05
        %v346 = vrsqrt.pop %v344
        %v347 = vmul.f32 %v346, %v344
        %v348 = vmul.f32 %v347, %v346
        %v349 = vmul.f32 0.5, %v348
        %v350 = vsub.f32 1.5, %v349
        %v351 = vmul.f32 %v346, %v350
        %vm352 = vweird.f32 %v344
        %vm353 = vweird.f32 %v346
        %vm354 = vmor %vm352, %vm353
        %v355 = vsel %vm354, %v346, %v351
        %v356 = vrsqrt.pop %v345
        %v357 = vmul.f32 %v356, %v345
        %v358 = vmul.f32 %v357, %v356
        %v359 = vmul.f32 0.5, %v358
        %v360 = vsub.f32 1.5, %v359
        %v361 = vmul.f32 %v356, %v360
        %vm362 = vweird.f32 %v345
        %vm363 = vweird.f32 %v356
        %vm364 = vmor %vm362, %vm363
        %v365 = vsel %vm364, %v356, %v361
        %v366 = vmul.f32 %v332, %v355
        %v367 = vmul.f32 %v333, %v365
        %v368 = vld [vmem:[%s6] sm:$0x1]
        %v369 = vperm.slane %v368, 0
        %v370 = vmul.f32 %v366, %v369
        %v371 = vmul.f32 %v367, %v369
        %v372 = vld [vmem:[%s6 + $0x2] sm:$0x1]
        %v373 = vperm.slane %v372, 0
        %v374 = vadd.f32 %v370, %v373
        %v375 = vadd.f32 %v371, %v373
        %v376 = vld [vmem:[%s3] sm:$0xff]
        %v377 = vld [vmem:[%s3 + $0x8] sm:$0xff]
        %v378 = vld [vmem:[%s3 + $0x10] sm:$0xff]
        %v379 = vld [vmem:[%s3 + $0x18] sm:$0xff]
        %v380 = vld [vmem:[%s6 + $0x4] sm:$0x1]
        %v381 = vperm.slane %v380, 0
        %v383 = vsel %vm316, %v374, 0
        %v386 = vsel %vm316, %v375, 0
        %388 = vmatpush.msra.mxu0 0.0
        %389 = vmatpush.msra.mxu0 0.0
        %390 = vmatpush.msra.mxu0 0.0
        %391 = vmatpush.msra.mxu0 0.0
        %392 = vmatpush.msra.mxu0 0.0
        %393 = vmatpush.msra.mxu0 0.0
        %394 = vmatpush.msra.mxu0 0.0
        %395 = vmatpush.msra.mxu0 0.0
        %396 = vmatpush.msra.mxu0 0.0
        %397 = vmatpush.msra.mxu0 0.0
        %398 = vmatpush.msra.mxu0 0.0
        %399 = vmatpush.msra.mxu0 0.0
        %400 = vmatpush.msra.mxu0 %v379
        %401 = vmatpush.msra.mxu0 %v378
        %402 = vmatpush.msra.mxu0 %v377
        %403 = vmatpush.msra.mxu0 %v376
        %404 = vmatmul.f32.gmra.mxu0 %v383
        %v405 = vpop.f32.mrf.mxu0
        %v406 = vadd.f32 %v381, %v405
        %407 = vmatmul.f32.gmra.mxu0 %v386
        %v408 = vpop.f32.mrf.mxu0
        %v409 = vadd.f32 %v381, %v408
        %410 = vdwg.mxu0
        %v411 = vmul.f32 %v406, %v406
        %v412 = vmul.f32 %v409, %v409
        %v413 = vmul.f32 %v406, %v411
        %v414 = vmul.f32 %v409, %v412
        %v415 = vmul.f32 %v413, 0.044715
        %v416 = vmul.f32 %v414, 0.044715
        %v417 = vadd.f32 %v406, %v415
        %v418 = vadd.f32 %v409, %v416
        %v419 = vmul.f32 %v417, 0.7978846
        %v420 = vmul.f32 %v418, 0.7978846
        %v421 = vtanh.pop %v419
        %v422 = vtanh.pop %v420
        %v423 = vadd.f32 %v421, 1.0
        %v424 = vadd.f32 %v422, 1.0
        %v425 = vmul.f32 %v423, 0.5
        %v426 = vmul.f32 %v424, 0.5
        %v427 = vmul.f32 %v406, %v425
        %v428 = vmul.f32 %v409, %v426
        %v429 = vld [vmem:[%s4] sm:$0xff]
        %v430 = vld [vmem:[%s4 + $0x8] sm:$0xff]
        %v431 = vld [vmem:[%s4 + $0x10] sm:$0xff]
        %v432 = vld [vmem:[%s4 + $0x18] sm:$0xff]
        %v433 = vld [vmem:[%s4 + $0x20] sm:$0xff]
        %v434 = vld [vmem:[%s4 + $0x28] sm:$0xff]
        %v435 = vld [vmem:[%s4 + $0x30] sm:$0xff]
        %v436 = vld [vmem:[%s4 + $0x38] sm:$0xff]
        %vm437 = vcmask 523264
        %v439 = vsel %vm437, %v427, 0
        %v442 = vsel %vm437, %v428, 0
        %444 = vmatpush.msra.mxu0 0.0
        %445 = vmatpush.msra.mxu0 0.0
        %446 = vmatpush.msra.mxu0 0.0
        %447 = vmatpush.msra.mxu0 0.0
        %448 = vmatpush.msra.mxu0 0.0
        %449 = vmatpush.msra.mxu0 0.0
        %450 = vmatpush.msra.mxu0 0.0
        %451 = vmatpush.msra.mxu0 0.0
        %452 = vmatpush.msra.mxu0 %v436
        %453 = vmatpush.msra.mxu0 %v435
        %454 = vmatpush.msra.mxu0 %v434
        %455 = vmatpush.msra.mxu0 %v433
        %456 = vmatpush.msra.mxu0 %v432
        %457 = vmatpush.msra.mxu0 %v431
        %458 = vmatpush.msra.mxu0 %v430
        %459 = vmatpush.msra.mxu0 %v429
        %460 = vmatmul.f32.gmra.mxu0 %v439
        %v461 = vpop.f32.mrf.mxu0
        %v462 = vadd.f32 0.0, %v461
        %463 = vmatmul.f32.gmra.mxu0 %v442
        %v464 = vpop.f32.mrf.mxu0
        %v465 = vadd.f32 0.0, %v464
        %466 = vdwg.mxu0
        %v467 = vadd.f32 %v311, %v462
        %v468 = vadd.f32 %v314, %v465
        %v469 = vld [vmem:[%s6 + $0x6] sm:$0x1]
        %v470 = vperm.slane %v469, 0
        %v471 = vadd.f32 %v467, %v470
        %v472 = vadd.f32 %v468, %v470
        %v473 = vsel %vm316, %v471, 0.0
        %474 = vadd.xlane.f32.xlu0 %v473
        %v475 = vpop.xlane.xlu0 %474
        %v476 = vsel %vm316, %v472, 0.0
        %477 = vadd.xlane.f32.xlu0 %v476
        %v478 = vpop.xlane.xlu0 %477
        %v479 = vmul.f32 %v475, %v329
        %v480 = vmul.f32 %v478, %v329
        %v481 = vsub.f32 %v471, %v479
        %v482 = vsub.f32 %v472, %v480
        %v483 = vmul.f32 %v481, %v481
        %v484 = vmul.f32 %v482, %v482
        %v485 = vsel %vm316, %v483, 0.0
        %486 = vadd.xlane.f32.xlu0 %v485
        %v487 = vpop.xlane.xlu0 %486
        %v488 = vsel %vm316, %v484, 0.0
        %489 = vadd.xlane.f32.xlu0 %v488
        %v490 = vpop.xlane.xlu0 %489
        %v491 = vmul.f32 %v487, %v329
        %v492 = vmul.f32 %v490, %v329
        %v493 = vadd.f32 %v491, 1e-05
        %v494 = vadd.f32 %v492, 1e-05
        %v495 = vrsqrt.pop %v493
        %v496 = vmul.f32 %v495, %v493
        %v497 = vmul.f32 %v496, %v495
        %v498 = vmul.f32 0.5, %v497
        %v499 = vsub.f32 1.5, %v498
        %v500 = vmul.f32 %v495, %v499
        %vm501 = vweird.f32 %v493
        %vm502 = vweird.f32 %v495
        %vm503 = vmor %vm501, %vm502
        %v504 = vsel %vm503, %v495, %v500
        %v505 = vrsqrt.pop %v494
        %v506 = vmul.f32 %v505, %v494
        %v507 = vmul.f32 %v506, %v505
        %v508 = vmul.f32 0.5, %v507
        %v509 = vsub.f32 1.5, %v508
        %v510 = vmul.f32 %v505, %v509
        %vm511 = vweird.f32 %v494
        %vm512 = vweird.f32 %v505
        %vm513 = vmor %vm511, %vm512
        %v514 = vsel %vm513, %v505, %v510
        %v515 = vmul.f32 %v481, %v504
        %v516 = vmul.f32 %v482, %v514
        %v517 = vld [vmem:[%s6 + $0x1] sm:$0x1]
        %v518 = vperm.slane %v517, 0
        %v519 = vmul.f32 %v515, %v518
        %v520 = vmul.f32 %v516, %v518
        %v521 = vld [vmem:[%s6 + $0x3] sm:$0x1]
        %v522 = vperm.slane %v521, 0
        %v523 = vadd.f32 %v519, %v522
        %v524 = vadd.f32 %v520, %v522
        %s525 = scalar_lea.vmem %s3, 32
        %v526 = vld [vmem:[%s525] sm:$0xff]
        %v527 = vld [vmem:[%s525 + $0x8] sm:$0xff]
        %v528 = vld [vmem:[%s525 + $0x10] sm:$0xff]
        %v529 = vld [vmem:[%s525 + $0x18] sm:$0xff]
        %v530 = vld [vmem:[%s6 + $0x5] sm:$0x1]
        %v531 = vperm.slane %v530, 0
        %v533 = vsel %vm316, %v523, 0
        %v536 = vsel %vm316, %v524, 0
        %538 = vmatpush.msra.mxu0 0.0
        %539 = vmatpush.msra.mxu0 0.0
        %540 = vmatpush.msra.mxu0 0.0
        %541 = vmatpush.msra.mxu0 0.0
        %542 = vmatpush.msra.mxu0 0.0
        %543 = vmatpush.msra.mxu0 0.0
        %544 = vmatpush.msra.mxu0 0.0
        %545 = vmatpush.msra.mxu0 0.0
        %546 = vmatpush.msra.mxu0 0.0
        %547 = vmatpush.msra.mxu0 0.0
        %548 = vmatpush.msra.mxu0 0.0
        %549 = vmatpush.msra.mxu0 0.0
        %550 = vmatpush.msra.mxu0 %v529
        %551 = vmatpush.msra.mxu0 %v528
        %552 = vmatpush.msra.mxu0 %v527
        %553 = vmatpush.msra.mxu0 %v526
        %554 = vmatmul.f32.gmra.mxu0 %v533
        %v555 = vpop.f32.mrf.mxu0
        %v556 = vadd.f32 %v531, %v555
        %557 = vmatmul.f32.gmra.mxu0 %v536
        %v558 = vpop.f32.mrf.mxu0
        %v559 = vadd.f32 %v531, %v558
        %560 = vdwg.mxu0
        %v561 = vmul.f32 %v556, %v556
        %v562 = vmul.f32 %v559, %v559
        %v563 = vmul.f32 %v556, %v561
        %v564 = vmul.f32 %v559, %v562
        %v565 = vmul.f32 %v563, 0.044715
        %v566 = vmul.f32 %v564, 0.044715
        %v567 = vadd.f32 %v556, %v565
        %v568 = vadd.f32 %v559, %v566
        %v569 = vmul.f32 %v567, 0.7978846
        %v570 = vmul.f32 %v568, 0.7978846
        %v571 = vtanh.pop %v569
        %v572 = vtanh.pop %v570
        %v573 = vadd.f32 %v571, 1.0
        %v574 = vadd.f32 %v572, 1.0
        %v575 = vmul.f32 %v573, 0.5
        %v576 = vmul.f32 %v574, 0.5
        %v577 = vmul.f32 %v556, %v575
        %v578 = vmul.f32 %v559, %v576
        %s579 = scalar_lea.vmem %s4, 64
        %v580 = vld [vmem:[%s579] sm:$0xff]
        %v581 = vld [vmem:[%s579 + $0x8] sm:$0xff]
        %v582 = vld [vmem:[%s579 + $0x10] sm:$0xff]
        %v583 = vld [vmem:[%s579 + $0x18] sm:$0xff]
        %v584 = vld [vmem:[%s579 + $0x20] sm:$0xff]
        %v585 = vld [vmem:[%s579 + $0x28] sm:$0xff]
        %v586 = vld [vmem:[%s579 + $0x30] sm:$0xff]
        %v587 = vld [vmem:[%s579 + $0x38] sm:$0xff]
        %v589 = vsel %vm437, %v577, 0
        %v592 = vsel %vm437, %v578, 0
        %594 = vmatpush.msra.mxu0 0.0
        %595 = vmatpush.msra.mxu0 0.0
        %596 = vmatpush.msra.mxu0 0.0
        %597 = vmatpush.msra.mxu0 0.0
        %598 = vmatpush.msra.mxu0 0.0
        %599 = vmatpush.msra.mxu0 0.0
        %600 = vmatpush.msra.mxu0 0.0
        %601 = vmatpush.msra.mxu0 0.0
        %602 = vmatpush.msra.mxu0 %v587
        %603 = vmatpush.msra.mxu0 %v586
        %604 = vmatpush.msra.mxu0 %v585
        %605 = vmatpush.msra.mxu0 %v584
        %606 = vmatpush.msra.mxu0 %v583
        %607 = vmatpush.msra.mxu0 %v582
        %608 = vmatpush.msra.mxu0 %v581
        %609 = vmatpush.msra.mxu0 %v580
        %610 = vmatmul.f32.gmra.mxu0 %v589
        %v611 = vpop.f32.mrf.mxu0
        %v612 = vadd.f32 0.0, %v611
        %613 = vmatmul.f32.gmra.mxu0 %v592
        %v614 = vpop.f32.mrf.mxu0
        %v615 = vadd.f32 0.0, %v614
        %616 = vdwg.mxu0
        %v617 = vadd.f32 %v471, %v612
        %v618 = vadd.f32 %v472, %v615
        %v619 = vld [vmem:[%s6 + $0x7] sm:$0x1]
        %v620 = vperm.slane %v619, 0
        %v621 = vadd.f32 %v617, %v620
        %v622 = vadd.f32 %v618, %v620
        %v623 = vsel %vm316, %v621, 0.0
        %624 = vadd.xlane.f32.xlu0 %v623
        %v625 = vpop.xlane.xlu0 %624
        %v626 = vsel %vm316, %v622, 0.0
        %627 = vadd.xlane.f32.xlu0 %v626
        %v628 = vpop.xlane.xlu0 %627
        %v629 = vmul.f32 %v625, %v329
        %v630 = vmul.f32 %v628, %v329
        %v631 = vsub.f32 %v621, %v629
        %v632 = vsub.f32 %v622, %v630
        %v633 = vmul.f32 %v631, %v631
        %v634 = vmul.f32 %v632, %v632
        %v635 = vsel %vm316, %v633, 0.0
        %636 = vadd.xlane.f32.xlu0 %v635
        %v637 = vpop.xlane.xlu0 %636
        %v638 = vsel %vm316, %v634, 0.0
        %639 = vadd.xlane.f32.xlu0 %v638
        %v640 = vpop.xlane.xlu0 %639
        %v641 = vmul.f32 %v637, %v329
        %v642 = vmul.f32 %v640, %v329
        %v643 = vadd.f32 %v641, 1e-05
        %v644 = vadd.f32 %v642, 1e-05
        %v645 = vrsqrt.pop %v643
        %v646 = vmul.f32 %v645, %v643
        %v647 = vmul.f32 %v646, %v645
        %v648 = vmul.f32 0.5, %v647
        %v649 = vsub.f32 1.5, %v648
        %v650 = vmul.f32 %v645, %v649
        %vm651 = vweird.f32 %v643
        %vm652 = vweird.f32 %v645
        %vm653 = vmor %vm651, %vm652
        %v654 = vsel %vm653, %v645, %v650
        %v655 = vrsqrt.pop %v644
        %v656 = vmul.f32 %v655, %v644
        %v657 = vmul.f32 %v656, %v655
        %v658 = vmul.f32 0.5, %v657
        %v659 = vsub.f32 1.5, %v658
        %v660 = vmul.f32 %v655, %v659
        %vm661 = vweird.f32 %v644
        %vm662 = vweird.f32 %v655
        %vm663 = vmor %vm661, %vm662
        %v664 = vsel %vm663, %v655, %v660
        %v665 = vmul.f32 %v631, %v654
        %v666 = vmul.f32 %v632, %v664
        %v667 = vld [vmem:[%s6 + $0x8] sm:$0x1]
        %v668 = vperm.slane %v667, 0
        %v669 = vmul.f32 %v665, %v668
        %v670 = vmul.f32 %v666, %v668
        %v671 = vld [vmem:[%s6 + $0x9] sm:$0x1]
        %v672 = vperm.slane %v671, 0
        %v673 = vadd.f32 %v669, %v672
        %v674 = vadd.f32 %v670, %v672
        %v675 = vsel %vm316, %v673, 0.0
        %v676 = vsel %vm316, %v674, 0.0
        %v677 = vadd.f32 %v675, %v676
        %v678 = vrot.slane %v677, 4
        %v679 = vadd.f32 %v677, %v678
        %v680 = vrot.slane %v679, 2
        %v681 = vadd.f32 %v679, %v680
        %v682 = vrot.slane %v681, 1
        %v683 = vadd.f32 %v681, %v682
        %v684 = vrcp.pop 16.0
        %v685 = vmul.f32 16.0, %v684
        %v686 = vsub.f32 1.0, %v685
        %v687 = vmul.f32 %v684, %v686
        %v688 = vadd.f32 %v684, %v687
        %vm689 = vweird.f32 %v684
        %v690 = vsel %vm689, %v684, %v688
        %v691 = vmul.f32 %v683, %v690
        %v692 = vld [vmem:[%s5] sm:$0xff]
        %v693 = vld [vmem:[%s5 + $0x8] sm:$0xff]
        %v694 = vld [vmem:[%s5 + $0x10] sm:$0xff]
        %v695 = vld [vmem:[%s5 + $0x18] sm:$0xff]
        %v696 = vld [vmem:[%s6 + $0xa] sm:$0x1]
        %v698 = vsel %vm316, %v691, 0
        %700 = vmatpush.msra.mxu0 0.0
        %701 = vmatpush.msra.mxu0 0.0
        %702 = vmatpush.msra.mxu0 0.0
        %703 = vmatpush.msra.mxu0 0.0
        %704 = vmatpush.msra.mxu0 0.0
        %705 = vmatpush.msra.mxu0 0.0
        %706 = vmatpush.msra.mxu0 0.0
        %707 = vmatpush.msra.mxu0 0.0
        %708 = vmatpush.msra.mxu0 0.0
        %709 = vmatpush.msra.mxu0 0.0
        %710 = vmatpush.msra.mxu0 0.0
        %711 = vmatpush.msra.mxu0 0.0
        %712 = vmatpush.msra.mxu0 %v695
        %713 = vmatpush.msra.mxu0 %v694
        %714 = vmatpush.msra.mxu0 %v693
        %715 = vmatpush.msra.mxu0 %v692
        %716 = vmatmul.f32.gmra.mxu0 %v698
        %v717 = vpop.f32.mrf.mxu0
        %v718 = vadd.f32 %v696, %v717
        %719 = vdwg.mxu0
        %v720 = vmul.f32 %v718, 0.033333335
        %v721 = vtanh.pop %v720
        %v722 = vmul.f32 %v721, 30.0
        %723 = vst [vmem:[%s270] sm:$0x1] %v722
        %s724 = sand.u32 %s181, 1
        %s725 = scalar_lea.sflag [#allocation3], %s724
        %s726 = sand.u32 %s181, 1
        %s727 = scalar_lea.vmem [#allocation2], %s726
        // Predicated region
        $region49: #{plstm_vision_model_forward.1} parent=47 // pred_check
          %p728 = pneg %p191
        $region50: #{plstm_vision_model_forward.1} parent=47 // pred_check_branch
          %730 = sbr.rel (%p728) target = $region52
        $region51: #{plstm_vision_model_forward.1} parent=47 // pred_region
          %732 = vsyncadd %s725, 0
          %s733 = scalar_lea.hbm %s7, %s21
          %s735 = sshll.u32 %s727, 4
          %s736 = int_to_ptr.vmem [resolvable:$true] %s735
          %s737 = sshll.u32 %s733, 4
          %s738 = int_to_ptr.hbm [resolvable:$true] %s737
          %740 = dma.vmem_to_hbm [thread:$0]  %s736, 16, %s738, %s725
        $region52: #{plstm_vision_model_forward.1} parent=47 // pred_fallthru
          _
      $region48: #{plstm_vision_model_forward.1} parent=5 // pred_fallthru
        _
      %p741 = scmp.le.s32.totalorder 2, %s16
      // Predicated region
      $region53: #{plstm_vision_model_forward.1} parent=5 // pred_check
        %p742 = pneg %p741
      $region54: #{plstm_vision_model_forward.1} parent=5 // pred_check_branch
        %744 = sbr.rel (%p742) target = $region56
      $region55: #{plstm_vision_model_forward.1} parent=5 // pred_region
        %s745 = ssub.s32 %s16, 2
        // Predicated region
        $region57: #{plstm_vision_model_forward.1} parent=55 // pred_check
          %p746 = pneg %p197
        $region58: #{plstm_vision_model_forward.1} parent=55 // pred_check_branch
          %748 = sbr.rel (%p746) target = $region60
        $region59: #{plstm_vision_model_forward.1} parent=55 // pred_region
          %s749 = sand.u32 %s182, 1
          %s750 = scalar_lea.sflag [#allocation3], %s749
          %s751 = sand.u32 %s182, 1
          %s752 = scalar_lea.vmem [#allocation2], %s751
          %754 = dma.done %s750, 16
        $region60: #{plstm_vision_model_forward.1} parent=55 // pred_fallthru
          _
      $region56: #{plstm_vision_model_forward.1} parent=5 // pred_fallthru
        _
    $region6: #{plstm_vision_model_forward.1} parent=1 // loop_footer
      %s20 = sadd.s32 1, %s16
    $region7: #{plstm_vision_model_forward.1} parent=1 // loop_footer_branch
      %15 = sbr.rel target = $region3
    $region8: #{plstm_vision_model_forward.1} parent=1 // loop_exit
      _
    %755 = vsyncpa [#allocation3], 1
    %s756 = scalar_lea.sflag [#allocation3], 1
    %757 = vsyncpa %s756, 1

</llo_original>
